<compile_context>
chip_gen: v7x
topology: tpu7x:2x2x1
jax: 0.10.0
libtpu: 0.0.40
codegen_flags: <defaults>
</compile_context>

<pallas_src>
import numpy as np
import jax
import jax.numpy as jnp
from jax import lax
from jax.experimental import pallas as pl
from jax.experimental.pallas import tpu as pltpu


def _diff_matrix(n: int, d: float) -> np.ndarray:
    """Finite difference operator D (n x n): out[i] = sum_j D[i, j] * f[j]."""
    D = np.zeros((n, n), dtype=np.float32)
    for i in range(1, n - 1):
        D[i, i - 1] = -1.0 / (2.0 * d)
        D[i, i + 1] = 1.0 / (2.0 * d)
    # one-sided at the boundaries
    D[0, 0] = -1.0 / d
    D[0, 1] = 1.0 / d
    D[n - 1, n - 2] = -1.0 / d
    D[n - 1, n - 1] = 1.0 / d
    return D


def _make_kernel(N: int, HW: int, TB: int):
    def kernel(var_ref, drho_ref, opx_ref, opy_ref,
               rt_ref, res_ref, max_ref, sq_ref):
        # var_ref : (TB, 3*HW)  flattened rho/u/v channels (lane-dense)
        # drho_ref: (TB, HW)    flattened drho_dt channel
        # opx_ref : (HW, HW)    I_H (x) Dx^T   (right-multiply => d/dx)
        # opy_ref : (HW, HW)    Dy^T (x) I_W   (right-multiply => d/dy)
        rho = var_ref[:, :HW] * 20.0                       # (TB, HW)
        u = (var_ref[:, HW:2 * HW] + 200.0) * 1500.0
        v = (var_ref[:, 2 * HW:3 * HW] + 500.0) * 1500.0
        drho_dt = drho_ref[...] * 20.0

        f = rho * u
        g = rho * v

        rt = (jnp.dot(f, opx_ref[...], preferred_element_type=jnp.float32) +
              jnp.dot(g, opy_ref[...], preferred_element_type=jnp.float32))
        res = drho_dt - rt

        rt_ref[...] = rt
        res_ref[...] = res

        # Fused per-step reduction partials (combined in the wrapper).
        # Mask rows that lie past N in a partial last batch tile.
        row = pl.program_id(0) * TB + lax.broadcasted_iota(jnp.int32, (TB, 1), 0)
        valid = row < N
        abs_r = jnp.where(valid, jnp.abs(res), 0.0)
        sq_r = jnp.where(valid, res * res, 0.0)
        max_ref[...] = jnp.max(abs_r).reshape(1, 1, 1)
        sq_ref[...] = jnp.sum(sq_r).reshape(1, 1, 1)

    return kernel


def mass_eq_pallas(var, dvar_dt, X_len=0.2, Y_len=0.4, tb=256):
    # tb: batch tile per grid step.  Sweep per generation: ~128-256 on v5e,
    # 512-2048 on v6e, <=~1024 (and >=2 grid steps) on v7x.
    N, C, H, W = var.shape
    assert C == 5
    HW = H * W

    # Faithful to the PyTorch module (rho has shape (N,1,H,W)):
    #   dx = X_len / rho.shape[2] == X_len / H
    #   dy = Y_len / rho.shape[1] == Y_len / 1
    dx = X_len / H
    dy = Y_len / 1.0

    Dx = _diff_matrix(W, dx)   # (W, W)
    Dy = _diff_matrix(H, dy)   # (H, H)
    eyeH = np.eye(H, dtype=np.float32)
    eyeW = np.eye(W, dtype=np.float32)
    opx = jnp.asarray(np.kron(eyeH, Dx.T))   # (HW, HW): f_flat @ opx == dfdx
    opy = jnp.asarray(np.kron(Dy.T, eyeW))   # (HW, HW): g_flat @ opy == dfdy

    TB = tb if N > tb else N                  # TB==N or a multiple of 8
    G = pl.cdiv(N, TB)

    # Free row-major reshapes (no data movement); the BlockSpecs window the
    # used channels, so no dead DMA traffic and no wrapper-side copies.
    var_flat = var.reshape(N, C * HW)
    dvar_flat = dvar_dt.reshape(N, C * HW)

    out_shapes = (
        jax.ShapeDtypeStruct((N, HW), jnp.float32),      # residual_t (flat)
        jax.ShapeDtypeStruct((N, HW), jnp.float32),      # residual   (flat)
        jax.ShapeDtypeStruct((G, 1, 1), jnp.float32),    # per-step max|res|
        jax.ShapeDtypeStruct((G, 1, 1), jnp.float32),    # per-step sum(res^2)
    )

    flops = 2.0 * N * HW * HW * 2 + 10.0 * N * HW
    bytes_accessed = 4.0 * (N * HW * 6 + 2 * HW * HW)

    rt, res, max_part, sq_part = pl.pallas_call(
        _make_kernel(N, HW, TB),
        out_shape=out_shapes,
        grid=(G,),
        in_specs=[
            pl.BlockSpec((TB, 3 * HW), lambda n: (n, 0)),  # rho/u/v channels
            pl.BlockSpec((TB, HW), lambda n: (n, 0)),      # drho_dt channel
            pl.BlockSpec((HW, HW), lambda n: (0, 0)),      # d/dx operator
            pl.BlockSpec((HW, HW), lambda n: (0, 0)),      # d/dy operator
        ],
        out_specs=[
            pl.BlockSpec((TB, HW), lambda n: (n, 0)),
            pl.BlockSpec((TB, HW), lambda n: (n, 0)),
            pl.BlockSpec((1, 1, 1), lambda n: (n, 0, 0)),
            pl.BlockSpec((1, 1, 1), lambda n: (n, 0, 0)),
        ],
        compiler_params=pltpu.CompilerParams(
            dimension_semantics=("parallel",),
            vmem_limit_bytes=32 * 1024 * 1024,
        ),
        cost_estimate=pl.CostEstimate(
            flops=int(flops), transcendentals=0,
            bytes_accessed=int(bytes_accessed)),
    )(var_flat, dvar_flat, opx, opy)

    # Combine the tiny per-step partials (plain-JAX glue):
    #   mean((res / max)^2) == sum(res^2) / (max^2 * count)
    max_all = jnp.max(max_part)
    mse = jnp.sum(sq_part) / (max_all * max_all * jnp.float32(N * HW))

    # Restore the NCHW (N,1,H,W) shape (free reshapes, no compute).
    return mse, rt.reshape(N, 1, H, W), res.reshape(N, 1, H, W)


def _ref_forward(var, dvar_dt, X_len=0.2, Y_len=0.4):
    """Pure-JAX reference matching the PyTorch forward semantics."""
    N, C, H, W = var.shape
    dx = X_len / H
    dy = Y_len / 1.0
    Dx = jnp.asarray(_diff_matrix(W, dx))
    Dy = jnp.asarray(_diff_matrix(H, dy))

    rho = var[:, 0] * 20.0
    u = (var[:, 1] + 200.0) * 1500.0
    v = (var[:, 2] + 500.0) * 1500.0
    drho_dt = dvar_dt[:, 0] * 20.0

    f = rho * u
    g = rho * v
    dfdx = jnp.einsum("nhw,iw->nhi", f, Dx)
    dfdy = jnp.einsum("ih,nhw->niw", Dy, g)
    rt = dfdx + dfdy
    res = drho_dt - rt
    rn = res / jnp.max(jnp.abs(res))
    mse = jnp.mean(rn * rn)
    return mse, rt[:, None], res[:, None]


if __name__ == "__main__":
    key = jax.random.PRNGKey(0)
    k1, k2 = jax.random.split(key)
    var = jax.random.normal(k1, (4, 5, 16, 16), dtype=jnp.float32)
    dvar_dt = jax.random.normal(k2, (4, 5, 16, 16), dtype=jnp.float32)

    mse, rt, res = mass_eq_pallas(var, dvar_dt)
    jax.block_until_ready((mse, rt, res))

    mse_r, rt_r, res_r = _ref_forward(var, dvar_dt)
    np.testing.assert_allclose(np.asarray(mse), np.asarray(mse_r), rtol=2e-3)
    np.testing.assert_allclose(
        np.asarray(rt), np.asarray(rt_r),
        rtol=2e-3, atol=2e-3 * float(np.max(np.abs(rt_r))))
    np.testing.assert_allclose(
        np.asarray(res), np.asarray(res_r),
        rtol=2e-3, atol=2e-3 * float(np.max(np.abs(res_r))))

    print("KERNEL_OK")
</pallas_src>

<mosaic_0001>
module attributes {stable_mosaic.version = 11 : i64} {
  func.func @kernel(%arg0: i32, %arg1: memref<4x768xf32, #tpu.memory_space<vmem>>, %arg2: memref<4x256xf32, #tpu.memory_space<vmem>>, %arg3: memref<256x256xf32, #tpu.memory_space<vmem>>, %arg4: memref<256x256xf32, #tpu.memory_space<vmem>>, %arg5: memref<4x256xf32, #tpu.memory_space<vmem>>, %arg6: memref<4x256xf32, #tpu.memory_space<vmem>>, %arg7: memref<1x1x1xf32, #tpu.memory_space<vmem>>, %arg8: memref<1x1x1xf32, #tpu.memory_space<vmem>>) attributes {dimension_semantics = [#tpu.dimension_semantics<parallel>], iteration_bounds = array<i64: 1>, scalar_prefetch = 0 : i64, scratch_operands = 0 : i64, tpu.core_type = #tpu.core_type<tc>, window_params = [{transform_indices = @transform_0, window_bounds = array<i64: 4, 768>}, {transform_indices = @transform_1, window_bounds = array<i64: 4, 256>}, {pipeline_mode = #tpu.pipeline_mode<synchronous>, transform_indices = @transform_2, window_bounds = array<i64: 256, 256>}, {pipeline_mode = #tpu.pipeline_mode<synchronous>, transform_indices = @transform_3, window_bounds = array<i64: 256, 256>}, {transform_indices = @transform_4, window_bounds = array<i64: 4, 256>}, {transform_indices = @transform_5, window_bounds = array<i64: 4, 256>}, {transform_indices = @transform_6, window_bounds = array<i64: 1, 1, 1>}, {transform_indices = @transform_7, window_bounds = array<i64: 1, 1, 1>}]} {
    %c0 = arith.constant 0 : index
    %c0_0 = arith.constant 0 : index
    %0 = vector.load %arg1[%c0, %c0_0] : memref<4x768xf32, #tpu.memory_space<vmem>>, vector<4x256xf32>
    %cst = arith.constant 2.000000e+01 : f32
    %1 = vector.broadcast %cst : f32 to vector<4x256xf32>
    %2 = arith.mulf %0, %1 : vector<4x256xf32>
    %c0_1 = arith.constant 0 : index
    %c256 = arith.constant 256 : index
    %3 = vector.load %arg1[%c0_1, %c256] : memref<4x768xf32, #tpu.memory_space<vmem>>, vector<4x256xf32>
    %cst_2 = arith.constant 2.000000e+02 : f32
    %4 = vector.broadcast %cst_2 : f32 to vector<4x256xf32>
    %5 = arith.addf %3, %4 : vector<4x256xf32>
    %cst_3 = arith.constant 1.500000e+03 : f32
    %6 = vector.broadcast %cst_3 : f32 to vector<4x256xf32>
    %7 = arith.mulf %5, %6 : vector<4x256xf32>
    %c0_4 = arith.constant 0 : index
    %c512 = arith.constant 512 : index
    %8 = vector.load %arg1[%c0_4, %c512] : memref<4x768xf32, #tpu.memory_space<vmem>>, vector<4x256xf32>
    %cst_5 = arith.constant 5.000000e+02 : f32
    %9 = vector.broadcast %cst_5 : f32 to vector<4x256xf32>
    %10 = arith.addf %8, %9 : vector<4x256xf32>
    %cst_6 = arith.constant 1.500000e+03 : f32
    %11 = vector.broadcast %cst_6 : f32 to vector<4x256xf32>
    %12 = arith.mulf %10, %11 : vector<4x256xf32>
    %c0_7 = arith.constant 0 : index
    %c0_8 = arith.constant 0 : index
    %13 = vector.load %arg2[%c0_7, %c0_8] : memref<4x256xf32, #tpu.memory_space<vmem>>, vector<4x256xf32>
    %cst_9 = arith.constant 2.000000e+01 : f32
    %14 = vector.broadcast %cst_9 : f32 to vector<4x256xf32>
    %15 = arith.mulf %13, %14 : vector<4x256xf32>
    %16 = arith.mulf %2, %7 : vector<4x256xf32>
    %17 = arith.mulf %2, %12 : vector<4x256xf32>
    %c0_10 = arith.constant 0 : index
    %c0_11 = arith.constant 0 : index
    %18 = vector.load %arg3[%c0_10, %c0_11] : memref<256x256xf32, #tpu.memory_space<vmem>>, vector<256x256xf32>
    %cst_12 = arith.constant dense<0.000000e+00> : vector<4x256xf32>
    %19 = tpu.matmul %16, %18, %cst_12 {dimension_numbers = #tpu.dot_dimension_numbers<[1], [0], [0], [1], [0, 0, 1, 1], [], []>} : vector<4x256xf32>, vector<256x256xf32>, vector<4x256xf32> -> vector<4x256xf32>
    %c0_13 = arith.constant 0 : index
    %c0_14 = arith.constant 0 : index
    %20 = vector.load %arg4[%c0_13, %c0_14] : memref<256x256xf32, #tpu.memory_space<vmem>>, vector<256x256xf32>
    %cst_15 = arith.constant dense<0.000000e+00> : vector<4x256xf32>
    %21 = tpu.matmul %17, %20, %cst_15 {dimension_numbers = #tpu.dot_dimension_numbers<[1], [0], [0], [1], [0, 0, 1, 1], [], []>} : vector<4x256xf32>, vector<256x256xf32>, vector<4x256xf32> -> vector<4x256xf32>
    %22 = arith.addf %19, %21 : vector<4x256xf32>
    %23 = arith.subf %15, %22 : vector<4x256xf32>
    %c0_16 = arith.constant 0 : index
    %c0_17 = arith.constant 0 : index
    %24 = vector.load %arg5[%c0_16, %c0_17] : memref<4x256xf32, #tpu.memory_space<vmem>>, vector<4x256xf32>
    tpu.vector_store %arg5[%c0_16, %c0_17], %22 {strides = array<i32>} : memref<4x256xf32, #tpu.memory_space<vmem>>, vector<4x256xf32>,
    %c0_18 = arith.constant 0 : index
    %c0_19 = arith.constant 0 : index
    %25 = vector.load %arg6[%c0_18, %c0_19] : memref<4x256xf32, #tpu.memory_space<vmem>>, vector<4x256xf32>
    tpu.vector_store %arg6[%c0_18, %c0_19], %23 {strides = array<i32>} : memref<4x256xf32, #tpu.memory_space<vmem>>, vector<4x256xf32>,
    %c4_i32 = arith.constant 4 : i32
    %26 = arith.muli %arg0, %c4_i32 : i32
    %27 = tpu.iota {dimensions = array<i32: 0>} : vector<4x1xi32>
    %28 = vector.broadcast %26 : i32 to vector<4x1xi32>
    %29 = arith.addi %28, %27 : vector<4x1xi32>
    %c4_i32_20 = arith.constant 4 : i32
    %30 = vector.broadcast %c4_i32_20 : i32 to vector<4x1xi32>
    %31 = arith.cmpi slt, %29, %30 : vector<4x1xi32>
    %32 = math.absf %23 : vector<4x256xf32>
    %cst_21 = arith.constant 0.000000e+00 : f32
    %33 = vector.shape_cast %31 : vector<4x1xi1> to vector<4x1xi1>
    %34 = vector.broadcast %33 : vector<4x1xi1> to vector<4x256xi1>
    %35 = vector.broadcast %cst_21 : f32 to vector<4x256xf32>
    %36 = arith.select %34, %32, %35 : vector<4x256xi1>, vector<4x256xf32>
    %37 = arith.mulf %23, %23 : vector<4x256xf32>
    %cst_22 = arith.constant 0.000000e+00 : f32
    %38 = vector.shape_cast %31 : vector<4x1xi1> to vector<4x1xi1>
    %39 = vector.broadcast %38 : vector<4x1xi1> to vector<4x256xi1>
    %40 = vector.broadcast %cst_22 : f32 to vector<4x256xf32>
    %41 = arith.select %39, %37, %40 : vector<4x256xi1>, vector<4x256xf32>
    %42 = vector.shape_cast %36 : vector<4x256xf32> to vector<1x4x256xf32>
    %cst_23 = arith.constant dense<0xFF800000> : vector<1xf32>
    %43 = vector.multi_reduction <maximumf>, %42, %cst_23 [1, 2] : vector<1x4x256xf32> to vector<1xf32>
    %44 = vector.shape_cast %43 : vector<1xf32> to vector<1x1x1xf32>
    %45 = vector.extract %44[0, 0, 0] : f32 from vector<1x1x1xf32>
    %46 = vector.broadcast %45 : f32 to vector<1x1x1xf32>
    %c0_24 = arith.constant 0 : index
    %c0_25 = arith.constant 0 : index
    %c0_26 = arith.constant 0 : index
    %47 = vector.load %arg7[%c0_24, %c0_25, %c0_26] : memref<1x1x1xf32, #tpu.memory_space<vmem>>, vector<1x1x1xf32>
    tpu.vector_store %arg7[%c0_24, %c0_25, %c0_26], %46 {strides = array<i32>} : memref<1x1x1xf32, #tpu.memory_space<vmem>>, vector<1x1x1xf32>,
    %48 = vector.shape_cast %41 : vector<4x256xf32> to vector<1x4x256xf32>
    %cst_27 = arith.constant dense<0.000000e+00> : vector<1xf32>
    %49 = vector.multi_reduction <add>, %48, %cst_27 [1, 2] : vector<1x4x256xf32> to vector<1xf32>
    %50 = vector.shape_cast %49 : vector<1xf32> to vector<1x1x1xf32>
    %51 = vector.extract %50[0, 0, 0] : f32 from vector<1x1x1xf32>
    %52 = vector.broadcast %51 : f32 to vector<1x1x1xf32>
    %c0_28 = arith.constant 0 : index
    %c0_29 = arith.constant 0 : index
    %c0_30 = arith.constant 0 : index
    %53 = vector.load %arg8[%c0_28, %c0_29, %c0_30] : memref<1x1x1xf32, #tpu.memory_space<vmem>>, vector<1x1x1xf32>
    tpu.vector_store %arg8[%c0_28, %c0_29, %c0_30], %52 {strides = array<i32>} : memref<1x1x1xf32, #tpu.memory_space<vmem>>, vector<1x1x1xf32>,
    return
  }
  func.func @transform_0(%arg0: i32) -> (i32, i32) {
    %c0_i32 = arith.constant 0 : i32
    %c0_i32_0 = arith.constant 0 : i32
    return %arg0, %c0_i32 : i32, i32
  }
  func.func @transform_1(%arg0: i32) -> (i32, i32) {
    %c0_i32 = arith.constant 0 : i32
    %c0_i32_0 = arith.constant 0 : i32
    return %arg0, %c0_i32 : i32, i32
  }
  func.func @transform_2(%arg0: i32) -> (i32, i32) {
    %c0_i32 = arith.constant 0 : i32
    %c0_i32_0 = arith.constant 0 : i32
    %c0_i32_1 = arith.constant 0 : i32
    return %c0_i32, %c0_i32_0 : i32, i32
  }
  func.func @transform_3(%arg0: i32) -> (i32, i32) {
    %c0_i32 = arith.constant 0 : i32
    %c0_i32_0 = arith.constant 0 : i32
    %c0_i32_1 = arith.constant 0 : i32
    return %c0_i32, %c0_i32_0 : i32, i32
  }
  func.func @transform_4(%arg0: i32) -> (i32, i32) {
    %c0_i32 = arith.constant 0 : i32
    %c0_i32_0 = arith.constant 0 : i32
    return %arg0, %c0_i32 : i32, i32
  }
  func.func @transform_5(%arg0: i32) -> (i32, i32) {
    %c0_i32 = arith.constant 0 : i32
    %c0_i32_0 = arith.constant 0 : i32
    return %arg0, %c0_i32 : i32, i32
  }
  func.func @transform_6(%arg0: i32) -> (i32, i32, i32) {
    %c0_i32 = arith.constant 0 : i32
    %c0_i32_0 = arith.constant 0 : i32
    %c0_i32_1 = arith.constant 0 : i32
    return %arg0, %c0_i32, %c0_i32_0 : i32, i32, i32
  }
  func.func @transform_7(%arg0: i32) -> (i32, i32, i32) {
    %c0_i32 = arith.constant 0 : i32
    %c0_i32_0 = arith.constant 0 : i32
    %c0_i32_1 = arith.constant 0 : i32
    return %arg0, %c0_i32, %c0_i32_0 : i32, i32, i32
  }
}

</mosaic_0001>

<llo_original>
// kernel: tpu_custom_call.1
$region0: #{tpu_custom_call.1}
  #allocation0 [shape = 'u32[]', space=smem, size = 0x4, offset = 0x4, fixed_abs, tag = 'smem constant byte address 0x4 - core index']
  #allocation1 [shape = 'u32[144,128]{1,0:T(1,128)}', space=vmem, size = 0x12000, scoped, tag = 'internal scratch']
  %s0 = inlined_call_operand.hbm [shape: f32[4,1280], index: 0, kind: input, shape index: {}]
  %s1 = inlined_call_operand.hbm [shape: f32[4,1280], index: 1, kind: input, shape index: {}]
  %s2 = inlined_call_operand.hbm [shape: f32[256,256], index: 2, kind: input, shape index: {}]
  %s3 = inlined_call_operand.hbm [shape: f32[256,256], index: 3, kind: input, shape index: {}]
  %s4 = inlined_call_operand.hbm [shape: f32[4,256], index: 4, kind: output, shape index: {0}]
  %s5 = inlined_call_operand.hbm [shape: f32[4,256], index: 5, kind: output, shape index: {1}]
  %s6 = inlined_call_operand.hbm [shape: f32[1,1,1], index: 6, kind: output, shape index: {2}]
  %s7 = inlined_call_operand.hbm [shape: f32[1,1,1], index: 7, kind: output, shape index: {3}]
  %8 = xla_tuple %s4, %s5, %s6, %s7
  %s9 = sld [smem:[#allocation0]]
  $region66: #{tpu_custom_call.1} parent=0
    _
  %s11 = ssub.s32 1, %s9
  %s12 = scalar_select 0, %s11, %s9
  $region1: #{tpu_custom_call.1} parent=0
    #allocation2 [shape = 'u8[12288]{0}', space=vmem, size = 0x3000, scoped, tag = 'input window, operand 0, single buffered']
    #allocation3 [shape = 's32[1]{0}', space=sflag, size = 0x4, scoped, tag = 'scoped memory for tpu_custom_call.1']
    #allocation4 [shape = 's32[1]{0}', space=sflag, size = 0x4, scoped, tag = 'scoped memory for tpu_custom_call.1']
    #allocation5 [shape = 'u8[4096]{0}', space=vmem, size = 0x1000, scoped, tag = 'input window, operand 1, single buffered']
    #allocation6 [shape = 's32[1]{0}', space=sflag, size = 0x4, scoped, tag = 'scoped memory for tpu_custom_call.1']
    #allocation7 [shape = 'u8[262144]{0}', space=vmem, size = 0x40000, scoped, tag = 'input window, operand 2, single buffered']
    #allocation8 [shape = 'u8[262144]{0}', space=vmem, size = 0x40000, scoped, tag = 'input window, operand 3, single buffered']
    #allocation9 [shape = 's32[1]{0}', space=sflag, size = 0x4, scoped, tag = 'scoped memory for tpu_custom_call.1']
    #allocation10 [shape = 'u8[4096]{0}', space=vmem, size = 0x1000, scoped, tag = 'output window, operand 0, single buffered']
    #allocation11 [shape = 'u8[4096]{0}', space=vmem, size = 0x1000, scoped, tag = 'output window, operand 1, single buffered']
    #allocation12 [shape = 's32[1]{0}', space=sflag, size = 0x4, scoped, tag = 'scoped memory for tpu_custom_call.1']
    #allocation13 [shape = 'u8[512]{0}', space=vmem, size = 0x400, scoped, tag = 'output window, operand 2, single buffered']
    #allocation14 [shape = 'u8[512]{0}', space=vmem, size = 0x400, scoped, tag = 'output window, operand 3, single buffered']
    #allocation15 [shape = 's32[1]{0}', space=sflag, size = 0x4, scoped, tag = 'scoped memory for tpu_custom_call.1']
    %13 = vsyncpa [#allocation3], 0
    %14 = vsyncpa [#allocation6], 0
    %15 = vsyncpa [#allocation9], 0
    %16 = vsyncpa [#allocation4], 0
    %17 = vsyncpa [#allocation12], 0
    %18 = vsyncpa [#allocation15], 0
    // Predicated region
    $region2: #{tpu_custom_call.1} parent=1 // pred_check
      _
    $region3: #{tpu_custom_call.1} parent=1 // pred_check_branch
      %20 = sbr.rel (0) target = $region5
    $region4: #{tpu_custom_call.1} parent=1 // pred_region
      %s22 = ssub.s32 384, 384
      %23 = vsyncadd [#allocation3], %s22
      %s25 = sshll.u32 [#allocation2], 4
      %s26 = int_to_ptr.vmem [resolvable:$true] %s25
      %28 = dma.hbm_to_vmem [thread:$0]  %s0, 384, %s26, [#allocation3]
    $region5: #{tpu_custom_call.1} parent=1 // pred_fallthru
      _
    // Predicated region
    $region6: #{tpu_custom_call.1} parent=1 // pred_check
      _
    $region7: #{tpu_custom_call.1} parent=1 // pred_check_branch
      %30 = sbr.rel (0) target = $region9
    $region8: #{tpu_custom_call.1} parent=1 // pred_region
      %s32 = ssub.s32 128, 128
      %33 = vsyncadd [#allocation6], %s32
      %s35 = sshll.u32 [#allocation5], 4
      %s36 = int_to_ptr.vmem [resolvable:$true] %s35
      %38 = dma.hbm_to_vmem [thread:$0]  %s1, 128, %s36, [#allocation6]
    $region9: #{tpu_custom_call.1} parent=1 // pred_fallthru
      _
    // Predicated region
    $region10: #{tpu_custom_call.1} parent=1 // pred_check
      _
    $region11: #{tpu_custom_call.1} parent=1 // pred_check_branch
      %40 = sbr.rel (0) target = $region13
    $region12: #{tpu_custom_call.1} parent=1 // pred_region
      %s42 = ssub.s32 8192, 8192
      %43 = vsyncadd [#allocation6], %s42
      %s44 = sshll.u32 [#allocation7], 4
      %s45 = int_to_ptr.vmem [resolvable:$true] %s44
      %50 = dma.hbm_to_vmem [thread:$0]  %s2, 8192, %s45, [#allocation6], 256, 256, 16
    $region13: #{tpu_custom_call.1} parent=1 // pred_fallthru
      _
    // Predicated region
    $region14: #{tpu_custom_call.1} parent=1 // pred_check
      _
    $region15: #{tpu_custom_call.1} parent=1 // pred_check_branch
      %52 = sbr.rel (0) target = $region17
    $region16: #{tpu_custom_call.1} parent=1 // pred_region
      %s54 = ssub.s32 8192, 8192
      %55 = vsyncadd [#allocation9], %s54
      %s56 = sshll.u32 [#allocation8], 4
      %s57 = int_to_ptr.vmem [resolvable:$true] %s56
      %62 = dma.hbm_to_vmem [thread:$0]  %s3, 8192, %s57, [#allocation9], 256, 256, 16
    $region17: #{tpu_custom_call.1} parent=1 // pred_fallthru
      _
    // Predicated region
    $region18: #{tpu_custom_call.1} parent=1 // pred_check
      _
    $region19: #{tpu_custom_call.1} parent=1 // pred_check_branch
      %64 = sbr.rel (0) target = $region21
    $region20: #{tpu_custom_call.1} parent=1 // pred_region
      %65 = dma.done [#allocation3], 384
    $region21: #{tpu_custom_call.1} parent=1 // pred_fallthru
      _
    // Predicated region
    $region22: #{tpu_custom_call.1} parent=1 // pred_check
      _
    $region23: #{tpu_custom_call.1} parent=1 // pred_check_branch
      %67 = sbr.rel (0) target = $region25
    $region24: #{tpu_custom_call.1} parent=1 // pred_region
      %68 = dma.done [#allocation6], 128
    $region25: #{tpu_custom_call.1} parent=1 // pred_fallthru
      _
    // Predicated region
    $region26: #{tpu_custom_call.1} parent=1 // pred_check
      _
    $region27: #{tpu_custom_call.1} parent=1 // pred_check_branch
      %70 = sbr.rel (0) target = $region29
    $region28: #{tpu_custom_call.1} parent=1 // pred_region
      %71 = dma.done [#allocation6], 8192
    $region29: #{tpu_custom_call.1} parent=1 // pred_fallthru
      _
    // Predicated region
    $region30: #{tpu_custom_call.1} parent=1 // pred_check
      _
    $region31: #{tpu_custom_call.1} parent=1 // pred_check_branch
      %73 = sbr.rel (0) target = $region33
    $region32: #{tpu_custom_call.1} parent=1 // pred_region
      %74 = dma.done [#allocation9], 8192
    $region33: #{tpu_custom_call.1} parent=1 // pred_fallthru
      _
    %v75 = vld [vmem:[#allocation2] sm:$0xff]
    %v76 = vmul.f32 %v75, 20.0
    %v77 = vld [vmem:[#allocation2 + $0x8] sm:$0xff]
    %v78 = vadd.f32 %v77, 200.0
    %v79 = vmul.f32 %v78, 1500.0
    %v80 = vld [vmem:[#allocation2 + $0x10] sm:$0xff]
    %v81 = vadd.f32 %v80, 500.0
    %v82 = vmul.f32 %v81, 1500.0
    %v83 = vld [vmem:[#allocation5] sm:$0xff]
    %v84 = vmul.f32 %v83, 20.0
    %v85 = vmul.f32 %v76, %v79
    %v86 = vmul.f32 %v76, %v82
    %v87 = vld [vmem:[#allocation7] sm:$0xff]
    %v88 = vld [vmem:[#allocation7 + $0x8] sm:$0xff]
    %v89 = vld [vmem:[#allocation7 + $0x10] sm:$0xff]
    %v90 = vld [vmem:[#allocation7 + $0x18] sm:$0xff]
    %v91 = vld [vmem:[#allocation7 + $0x20] sm:$0xff]
    %v92 = vld [vmem:[#allocation7 + $0x28] sm:$0xff]
    %v93 = vld [vmem:[#allocation7 + $0x30] sm:$0xff]
    %v94 = vld [vmem:[#allocation7 + $0x38] sm:$0xff]
    %v95 = vld [vmem:[#allocation7 + $0x40] sm:$0xff]
    %v96 = vld [vmem:[#allocation7 + $0x48] sm:$0xff]
    %v97 = vld [vmem:[#allocation7 + $0x50] sm:$0xff]
    %v98 = vld [vmem:[#allocation7 + $0x58] sm:$0xff]
    %v99 = vld [vmem:[#allocation7 + $0x60] sm:$0xff]
    %v100 = vld [vmem:[#allocation7 + $0x68] sm:$0xff]
    %v101 = vld [vmem:[#allocation7 + $0x70] sm:$0xff]
    %v102 = vld [vmem:[#allocation7 + $0x78] sm:$0xff]
    %v103 = vld [vmem:[#allocation7 + $0x80] sm:$0xff]
    %v104 = vld [vmem:[#allocation7 + $0x88] sm:$0xff]
    %v105 = vld [vmem:[#allocation7 + $0x90] sm:$0xff]
    %v106 = vld [vmem:[#allocation7 + $0x98] sm:$0xff]
    %v107 = vld [vmem:[#allocation7 + $0xa0] sm:$0xff]
    %v108 = vld [vmem:[#allocation7 + $0xa8] sm:$0xff]
    %v109 = vld [vmem:[#allocation7 + $0xb0] sm:$0xff]
    %v110 = vld [vmem:[#allocation7 + $0xb8] sm:$0xff]
    %v111 = vld [vmem:[#allocation7 + $0xc0] sm:$0xff]
    %v112 = vld [vmem:[#allocation7 + $0xc8] sm:$0xff]
    %v113 = vld [vmem:[#allocation7 + $0xd0] sm:$0xff]
    %v114 = vld [vmem:[#allocation7 + $0xd8] sm:$0xff]
    %v115 = vld [vmem:[#allocation7 + $0xe0] sm:$0xff]
    %v116 = vld [vmem:[#allocation7 + $0xe8] sm:$0xff]
    %v117 = vld [vmem:[#allocation7 + $0xf0] sm:$0xff]
    %v118 = vld [vmem:[#allocation7 + $0xf8] sm:$0xff]
    %v119 = vld [vmem:[#allocation7 + $0x100] sm:$0xff]
    %v120 = vld [vmem:[#allocation7 + $0x108] sm:$0xff]
    %v121 = vld [vmem:[#allocation7 + $0x110] sm:$0xff]
    %v122 = vld [vmem:[#allocation7 + $0x118] sm:$0xff]
    %v123 = vld [vmem:[#allocation7 + $0x120] sm:$0xff]
    %v124 = vld [vmem:[#allocation7 + $0x128] sm:$0xff]
    %v125 = vld [vmem:[#allocation7 + $0x130] sm:$0xff]
    %v126 = vld [vmem:[#allocation7 + $0x138] sm:$0xff]
    %v127 = vld [vmem:[#allocation7 + $0x140] sm:$0xff]
    %v128 = vld [vmem:[#allocation7 + $0x148] sm:$0xff]
    %v129 = vld [vmem:[#allocation7 + $0x150] sm:$0xff]
    %v130 = vld [vmem:[#allocation7 + $0x158] sm:$0xff]
    %v131 = vld [vmem:[#allocation7 + $0x160] sm:$0xff]
    %v132 = vld [vmem:[#allocation7 + $0x168] sm:$0xff]
    %v133 = vld [vmem:[#allocation7 + $0x170] sm:$0xff]
    %v134 = vld [vmem:[#allocation7 + $0x178] sm:$0xff]
    %v135 = vld [vmem:[#allocation7 + $0x180] sm:$0xff]
    %v136 = vld [vmem:[#allocation7 + $0x188] sm:$0xff]
    %v137 = vld [vmem:[#allocation7 + $0x190] sm:$0xff]
    %v138 = vld [vmem:[#allocation7 + $0x198] sm:$0xff]
    %v139 = vld [vmem:[#allocation7 + $0x1a0] sm:$0xff]
    %v140 = vld [vmem:[#allocation7 + $0x1a8] sm:$0xff]
    %v141 = vld [vmem:[#allocation7 + $0x1b0] sm:$0xff]
    %v142 = vld [vmem:[#allocation7 + $0x1b8] sm:$0xff]
    %v143 = vld [vmem:[#allocation7 + $0x1c0] sm:$0xff]
    %v144 = vld [vmem:[#allocation7 + $0x1c8] sm:$0xff]
    %v145 = vld [vmem:[#allocation7 + $0x1d0] sm:$0xff]
    %v146 = vld [vmem:[#allocation7 + $0x1d8] sm:$0xff]
    %v147 = vld [vmem:[#allocation7 + $0x1e0] sm:$0xff]
    %v148 = vld [vmem:[#allocation7 + $0x1e8] sm:$0xff]
    %v149 = vld [vmem:[#allocation7 + $0x1f0] sm:$0xff]
    %v150 = vld [vmem:[#allocation7 + $0x1f8] sm:$0xff]
    %v151 = vld [vmem:[#allocation8] sm:$0xff]
    %v152 = vld [vmem:[#allocation8 + $0x8] sm:$0xff]
    %v153 = vld [vmem:[#allocation8 + $0x10] sm:$0xff]
    %v154 = vld [vmem:[#allocation8 + $0x18] sm:$0xff]
    %v155 = vld [vmem:[#allocation8 + $0x20] sm:$0xff]
    %v156 = vld [vmem:[#allocation8 + $0x28] sm:$0xff]
    %v157 = vld [vmem:[#allocation8 + $0x30] sm:$0xff]
    %v158 = vld [vmem:[#allocation8 + $0x38] sm:$0xff]
    %v159 = vld [vmem:[#allocation8 + $0x40] sm:$0xff]
    %v160 = vld [vmem:[#allocation8 + $0x48] sm:$0xff]
    %v161 = vld [vmem:[#allocation8 + $0x50] sm:$0xff]
    %v162 = vld [vmem:[#allocation8 + $0x58] sm:$0xff]
    %v163 = vld [vmem:[#allocation8 + $0x60] sm:$0xff]
    %v164 = vld [vmem:[#allocation8 + $0x68] sm:$0xff]
    %v165 = vld [vmem:[#allocation8 + $0x70] sm:$0xff]
    %v166 = vld [vmem:[#allocation8 + $0x78] sm:$0xff]
    %v167 = vld [vmem:[#allocation8 + $0x80] sm:$0xff]
    %v168 = vld [vmem:[#allocation8 + $0x88] sm:$0xff]
    %v169 = vld [vmem:[#allocation8 + $0x90] sm:$0xff]
    %v170 = vld [vmem:[#allocation8 + $0x98] sm:$0xff]
    %v171 = vld [vmem:[#allocation8 + $0xa0] sm:$0xff]
    %v172 = vld [vmem:[#allocation8 + $0xa8] sm:$0xff]
    %v173 = vld [vmem:[#allocation8 + $0xb0] sm:$0xff]
    %v174 = vld [vmem:[#allocation8 + $0xb8] sm:$0xff]
    %v175 = vld [vmem:[#allocation8 + $0xc0] sm:$0xff]
    %v176 = vld [vmem:[#allocation8 + $0xc8] sm:$0xff]
    %v177 = vld [vmem:[#allocation8 + $0xd0] sm:$0xff]
    %v178 = vld [vmem:[#allocation8 + $0xd8] sm:$0xff]
    %v179 = vld [vmem:[#allocation8 + $0xe0] sm:$0xff]
    %v180 = vld [vmem:[#allocation8 + $0xe8] sm:$0xff]
    %v181 = vld [vmem:[#allocation8 + $0xf0] sm:$0xff]
    %v182 = vld [vmem:[#allocation8 + $0xf8] sm:$0xff]
    %v183 = vld [vmem:[#allocation8 + $0x100] sm:$0xff]
    %v184 = vld [vmem:[#allocation8 + $0x108] sm:$0xff]
    %v185 = vld [vmem:[#allocation8 + $0x110] sm:$0xff]
    %v186 = vld [vmem:[#allocation8 + $0x118] sm:$0xff]
    %v187 = vld [vmem:[#allocation8 + $0x120] sm:$0xff]
    %v188 = vld [vmem:[#allocation8 + $0x128] sm:$0xff]
    %v189 = vld [vmem:[#allocation8 + $0x130] sm:$0xff]
    %v190 = vld [vmem:[#allocation8 + $0x138] sm:$0xff]
    %v191 = vld [vmem:[#allocation8 + $0x140] sm:$0xff]
    %v192 = vld [vmem:[#allocation8 + $0x148] sm:$0xff]
    %v193 = vld [vmem:[#allocation8 + $0x150] sm:$0xff]
    %v194 = vld [vmem:[#allocation8 + $0x158] sm:$0xff]
    %v195 = vld [vmem:[#allocation8 + $0x160] sm:$0xff]
    %v196 = vld [vmem:[#allocation8 + $0x168] sm:$0xff]
    %v197 = vld [vmem:[#allocation8 + $0x170] sm:$0xff]
    %v198 = vld [vmem:[#allocation8 + $0x178] sm:$0xff]
    %v199 = vld [vmem:[#allocation8 + $0x180] sm:$0xff]
    %v200 = vld [vmem:[#allocation8 + $0x188] sm:$0xff]
    %v201 = vld [vmem:[#allocation8 + $0x190] sm:$0xff]
    %v202 = vld [vmem:[#allocation8 + $0x198] sm:$0xff]
    %v203 = vld [vmem:[#allocation8 + $0x1a0] sm:$0xff]
    %v204 = vld [vmem:[#allocation8 + $0x1a8] sm:$0xff]
    %v205 = vld [vmem:[#allocation8 + $0x1b0] sm:$0xff]
    %v206 = vld [vmem:[#allocation8 + $0x1b8] sm:$0xff]
    %v207 = vld [vmem:[#allocation8 + $0x1c0] sm:$0xff]
    %v208 = vld [vmem:[#allocation8 + $0x1c8] sm:$0xff]
    %v209 = vld [vmem:[#allocation8 + $0x1d0] sm:$0xff]
    %v210 = vld [vmem:[#allocation8 + $0x1d8] sm:$0xff]
    %v211 = vld [vmem:[#allocation8 + $0x1e0] sm:$0xff]
    %v212 = vld [vmem:[#allocation8 + $0x1e8] sm:$0xff]
    %v213 = vld [vmem:[#allocation8 + $0x1f0] sm:$0xff]
    %v214 = vld [vmem:[#allocation8 + $0x1f8] sm:$0xff]
    %v216 = vcombine.high %v86, %v86
    %218 = vmatprep.subr.mxu0 %v152
    %219 = vmatpush1.msra.mxu0 %v151
    %220 = vmatprep.subr.mxu0 %v154
    %221 = vmatpush1.msra.mxu0 %v153
    %222 = vmatprep.subr.mxu0 %v156
    %223 = vmatpush1.msra.mxu0 %v155
    %224 = vmatprep.subr.mxu0 %v158
    %225 = vmatpush1.msra.mxu0 %v157
    %226 = vmatprep.subr.mxu0 %v160
    %227 = vmatpush1.msra.mxu0 %v159
    %228 = vmatprep.subr.mxu0 %v162
    %229 = vmatpush1.msra.mxu0 %v161
    %230 = vmatprep.subr.mxu0 %v164
    %231 = vmatpush1.msra.mxu0 %v163
    %232 = vmatprep.subr.mxu0 %v166
    %233 = vmatpush1.msra.mxu0 %v165
    %234 = vmatprep.subr.mxu0 %v168
    %235 = vmatpush1.msra.mxu0 %v167
    %236 = vmatprep.subr.mxu0 %v170
    %237 = vmatpush1.msra.mxu0 %v169
    %238 = vmatprep.subr.mxu0 %v172
    %239 = vmatpush1.msra.mxu0 %v171
    %240 = vmatprep.subr.mxu0 %v174
    %241 = vmatpush1.msra.mxu0 %v173
    %242 = vmatprep.subr.mxu0 %v176
    %243 = vmatpush1.msra.mxu0 %v175
    %244 = vmatprep.subr.mxu0 %v178
    %245 = vmatpush1.msra.mxu0 %v177
    %246 = vmatprep.subr.mxu0 %v180
    %247 = vmatpush1.msra.mxu0 %v179
    %248 = vmatprep.subr.mxu0 %v182
    %249 = vmatpush1.msra.mxu0 %v181
    %250 = vmatprep.subr.mxu0 %v184
    %251 = vmatpush1.msra.mxu0 %v183
    %252 = vmatprep.subr.mxu0 %v186
    %253 = vmatpush1.msra.mxu0 %v185
    %254 = vmatprep.subr.mxu0 %v188
    %255 = vmatpush1.msra.mxu0 %v187
    %256 = vmatprep.subr.mxu0 %v190
    %257 = vmatpush1.msra.mxu0 %v189
    %258 = vmatprep.subr.mxu0 %v192
    %259 = vmatpush1.msra.mxu0 %v191
    %260 = vmatprep.subr.mxu0 %v194
    %261 = vmatpush1.msra.mxu0 %v193
    %262 = vmatprep.subr.mxu0 %v196
    %263 = vmatpush1.msra.mxu0 %v195
    %264 = vmatprep.subr.mxu0 %v198
    %265 = vmatpush1.msra.mxu0 %v197
    %266 = vmatprep.subr.mxu0 %v200
    %267 = vmatpush1.msra.mxu0 %v199
    %268 = vmatprep.subr.mxu0 %v202
    %269 = vmatpush1.msra.mxu0 %v201
    %270 = vmatprep.subr.mxu0 %v204
    %271 = vmatpush1.msra.mxu0 %v203
    %272 = vmatprep.subr.mxu0 %v206
    %273 = vmatpush1.msra.mxu0 %v205
    %274 = vmatprep.subr.mxu0 %v208
    %275 = vmatpush1.msra.mxu0 %v207
    %276 = vmatprep.subr.mxu0 %v210
    %277 = vmatpush1.msra.mxu0 %v209
    %278 = vmatprep.subr.mxu0 %v212
    %279 = vmatpush1.msra.mxu0 %v211
    %280 = vmatprep.subr.mxu0 %v214
    %281 = vmatpush1.msra.mxu0 %v213
    %282 = vmatprep.mubr.f32.mxu0 %v216
    %283 = vmatmul.mubr.f32.gmra.mrb[0].mxu0 %v86
    %v284 = vpop.f32.mrb[0].mxu0
    %v285 = vadd.f32 0.0, %v284
    %v286 = vpop.f32.mrb[0].mxu0
    %v287 = vadd.f32 0.0, %v286
    %288 = vdwg.mxu0
    %v290 = vcombine.high %v85, %v85
    %292 = vmatprep.subr.mxu0 %v88
    %293 = vmatpush1.msra.mxu0 %v87
    %294 = vmatprep.subr.mxu0 %v90
    %295 = vmatpush1.msra.mxu0 %v89
    %296 = vmatprep.subr.mxu0 %v92
    %297 = vmatpush1.msra.mxu0 %v91
    %298 = vmatprep.subr.mxu0 %v94
    %299 = vmatpush1.msra.mxu0 %v93
    %300 = vmatprep.subr.mxu0 %v96
    %301 = vmatpush1.msra.mxu0 %v95
    %302 = vmatprep.subr.mxu0 %v98
    %303 = vmatpush1.msra.mxu0 %v97
    %304 = vmatprep.subr.mxu0 %v100
    %305 = vmatpush1.msra.mxu0 %v99
    %306 = vmatprep.subr.mxu0 %v102
    %307 = vmatpush1.msra.mxu0 %v101
    %308 = vmatprep.subr.mxu0 %v104
    %309 = vmatpush1.msra.mxu0 %v103
    %310 = vmatprep.subr.mxu0 %v106
    %311 = vmatpush1.msra.mxu0 %v105
    %312 = vmatprep.subr.mxu0 %v108
    %313 = vmatpush1.msra.mxu0 %v107
    %314 = vmatprep.subr.mxu0 %v110
    %315 = vmatpush1.msra.mxu0 %v109
    %316 = vmatprep.subr.mxu0 %v112
    %317 = vmatpush1.msra.mxu0 %v111
    %318 = vmatprep.subr.mxu0 %v114
    %319 = vmatpush1.msra.mxu0 %v113
    %320 = vmatprep.subr.mxu0 %v116
    %321 = vmatpush1.msra.mxu0 %v115
    %322 = vmatprep.subr.mxu0 %v118
    %323 = vmatpush1.msra.mxu0 %v117
    %324 = vmatprep.subr.mxu0 %v120
    %325 = vmatpush1.msra.mxu0 %v119
    %326 = vmatprep.subr.mxu0 %v122
    %327 = vmatpush1.msra.mxu0 %v121
    %328 = vmatprep.subr.mxu0 %v124
    %329 = vmatpush1.msra.mxu0 %v123
    %330 = vmatprep.subr.mxu0 %v126
    %331 = vmatpush1.msra.mxu0 %v125
    %332 = vmatprep.subr.mxu0 %v128
    %333 = vmatpush1.msra.mxu0 %v127
    %334 = vmatprep.subr.mxu0 %v130
    %335 = vmatpush1.msra.mxu0 %v129
    %336 = vmatprep.subr.mxu0 %v132
    %337 = vmatpush1.msra.mxu0 %v131
    %338 = vmatprep.subr.mxu0 %v134
    %339 = vmatpush1.msra.mxu0 %v133
    %340 = vmatprep.subr.mxu0 %v136
    %341 = vmatpush1.msra.mxu0 %v135
    %342 = vmatprep.subr.mxu0 %v138
    %343 = vmatpush1.msra.mxu0 %v137
    %344 = vmatprep.subr.mxu0 %v140
    %345 = vmatpush1.msra.mxu0 %v139
    %346 = vmatprep.subr.mxu0 %v142
    %347 = vmatpush1.msra.mxu0 %v141
    %348 = vmatprep.subr.mxu0 %v144
    %349 = vmatpush1.msra.mxu0 %v143
    %350 = vmatprep.subr.mxu0 %v146
    %351 = vmatpush1.msra.mxu0 %v145
    %352 = vmatprep.subr.mxu0 %v148
    %353 = vmatpush1.msra.mxu0 %v147
    %354 = vmatprep.subr.mxu0 %v150
    %355 = vmatpush1.msra.mxu0 %v149
    %356 = vmatprep.mubr.f32.mxu0 %v290
    %357 = vmatmul.mubr.f32.gmra.mrb[0].mxu0 %v85
    %v358 = vpop.f32.mrb[0].mxu0
    %v359 = vadd.f32 %v285, %v358
    %v360 = vpop.f32.mrb[0].mxu0
    %v361 = vadd.f32 %v287, %v360
    %362 = vdwg.mxu0
    %v365 = vcombine.low %v359, %v361
    %v367 = vsub.f32 %v84, %v365
    %368 = vst [vmem:[#allocation10] sm:$0xff] %v365
    %369 = vst [vmem:[#allocation11] sm:$0xff] %v367
    %s370 = smul.u32 0, 4
    %v371 = vlaneseq
    %v372 = vshrl.u32 %v371, 7
    %v373 = vstv %s370
    %v374 = vadd.s32 %v373, %v372
    %vm375 = vcmp.lt.s32.totalorder %v374, 4
    %v376 = vand.u32 2147483647, %v367
    %v377 = vsel %vm375, 1, 0
    %vm378 = vcmp.eq.s32.totalorder %v377, 1
    %v380 = vcombine.high %v376, %v376
    %v382 = vsel %vm378, %v376, 0.0
    %v383 = vsel %vm378, %v380, 0.0
    %v384 = vmul.f32 %v367, %v367
    %v386 = vcombine.high %v384, %v384
    %v388 = vsel %vm378, %v384, 0.0
    %v389 = vsel %vm378, %v386, 0.0
    %vm390 = vcmask 1043456
    %v391 = vsel %vm390, %v382, -inf
    %v392 = vsel %vm390, %v383, -inf
    %v393 = vmax.f32 %v391, %v392
    %394 = vmax.xlane.f32.xlu0 %v393
    %v395 = vpop.xlane.xlu0 %394
    %v396 = vrot.slane %v395, 4
    %v397 = vmax.f32 %v395, %v396
    %v398 = vrot.slane %v397, 2
    %v399 = vmax.f32 %v397, %v398
    %v400 = vrot.slane %v399, 1
    %v401 = vmax.f32 %v399, %v400
    %s402 = vtos %v401
    %v403 = vstv %s402
    %vm404 = vcmask 0
    %405 = vst.msk [vmem:[#allocation13] sm:$0x1] %vm404, %v403
    %v406 = vsel %vm390, %v388, 0.0
    %v407 = vsel %vm390, %v389, 0.0
    %v408 = vadd.f32 %v406, %v407
    %409 = vadd.xlane.f32.xlu0 %v408
    %v410 = vpop.xlane.xlu0 %409
    %v411 = vrot.slane %v410, 4
    %v412 = vadd.f32 %v410, %v411
    %v413 = vrot.slane %v412, 2
    %v414 = vadd.f32 %v412, %v413
    %v415 = vrot.slane %v414, 1
    %v416 = vadd.f32 %v414, %v415
    %s417 = vtos %v416
    %v418 = vstv %s417
    %419 = vst.msk [vmem:[#allocation14] sm:$0x1] %vm404, %v418
    // Predicated region
    $region34: #{tpu_custom_call.1} parent=1 // pred_check
      _
    $region35: #{tpu_custom_call.1} parent=1 // pred_check_branch
      %421 = sbr.rel (0) target = $region37
    $region36: #{tpu_custom_call.1} parent=1 // pred_region
      %s423 = ssub.s32 128, 128
      %424 = vsyncadd [#allocation4], %s423
      %s426 = sshll.u32 [#allocation10], 4
      %s427 = int_to_ptr.vmem [resolvable:$true] %s426
      %429 = dma.vmem_to_hbm [thread:$0]  %s427, 128, %s4, [#allocation4]
    $region37: #{tpu_custom_call.1} parent=1 // pred_fallthru
      _
    // Predicated region
    $region38: #{tpu_custom_call.1} parent=1 // pred_check
      _
    $region39: #{tpu_custom_call.1} parent=1 // pred_check_branch
      %431 = sbr.rel (0) target = $region41
    $region40: #{tpu_custom_call.1} parent=1 // pred_region
      %s433 = ssub.s32 128, 128
      %434 = vsyncadd [#allocation12], %s433
      %s436 = sshll.u32 [#allocation11], 4
      %s437 = int_to_ptr.vmem [resolvable:$true] %s436
      %439 = dma.vmem_to_hbm [thread:$0]  %s437, 128, %s5, [#allocation12]
    $region41: #{tpu_custom_call.1} parent=1 // pred_fallthru
      _
    // Predicated region
    $region42: #{tpu_custom_call.1} parent=1 // pred_check
      _
    $region43: #{tpu_custom_call.1} parent=1 // pred_check_branch
      %441 = sbr.rel (0) target = $region45
    $region44: #{tpu_custom_call.1} parent=1 // pred_region
      %s443 = ssub.s32 16, 16
      %444 = vsyncadd [#allocation12], %s443
      %s446 = sshll.u32 [#allocation13], 4
      %s447 = int_to_ptr.vmem [resolvable:$true] %s446
      %449 = dma.vmem_to_hbm [thread:$0]  %s447, 16, %s6, [#allocation12]
    $region45: #{tpu_custom_call.1} parent=1 // pred_fallthru
      _
    // Predicated region
    $region46: #{tpu_custom_call.1} parent=1 // pred_check
      _
    $region47: #{tpu_custom_call.1} parent=1 // pred_check_branch
      %451 = sbr.rel (0) target = $region49
    $region48: #{tpu_custom_call.1} parent=1 // pred_region
      %s453 = ssub.s32 16, 16
      %454 = vsyncadd [#allocation15], %s453
      %s456 = sshll.u32 [#allocation14], 4
      %s457 = int_to_ptr.vmem [resolvable:$true] %s456
      %459 = dma.vmem_to_hbm [thread:$0]  %s457, 16, %s7, [#allocation15]
    $region49: #{tpu_custom_call.1} parent=1 // pred_fallthru
      _
    // Predicated region
    $region50: #{tpu_custom_call.1} parent=1 // pred_check
      _
    $region51: #{tpu_custom_call.1} parent=1 // pred_check_branch
      %461 = sbr.rel (0) target = $region53
    $region52: #{tpu_custom_call.1} parent=1 // pred_region
      %462 = dma.done [#allocation4], 128
    $region53: #{tpu_custom_call.1} parent=1 // pred_fallthru
      _
    // Predicated region
    $region54: #{tpu_custom_call.1} parent=1 // pred_check
      _
    $region55: #{tpu_custom_call.1} parent=1 // pred_check_branch
      %464 = sbr.rel (0) target = $region57
    $region56: #{tpu_custom_call.1} parent=1 // pred_region
      %465 = dma.done [#allocation12], 128
    $region57: #{tpu_custom_call.1} parent=1 // pred_fallthru
      _
    // Predicated region
    $region58: #{tpu_custom_call.1} parent=1 // pred_check
      _
    $region59: #{tpu_custom_call.1} parent=1 // pred_check_branch
      %467 = sbr.rel (0) target = $region61
    $region60: #{tpu_custom_call.1} parent=1 // pred_region
      %468 = dma.done [#allocation12], 16
    $region61: #{tpu_custom_call.1} parent=1 // pred_fallthru
      _
    // Predicated region
    $region62: #{tpu_custom_call.1} parent=1 // pred_check
      _
    $region63: #{tpu_custom_call.1} parent=1 // pred_check_branch
      %470 = sbr.rel (0) target = $region65
    $region64: #{tpu_custom_call.1} parent=1 // pred_region
      %471 = dma.done [#allocation15], 16
    $region65: #{tpu_custom_call.1} parent=1 // pred_fallthru
      _
    %472 = vsyncpa [#allocation3], 1
    %473 = vsyncpa [#allocation6], 1
    %474 = vsyncpa [#allocation9], 1
    %475 = vsyncpa [#allocation4], 1
    %476 = vsyncpa [#allocation12], 1
    %477 = vsyncpa [#allocation15], 1

</llo_original>
